<compile_context>
chip_gen: v7x
topology: tpu7x:2x2x1
jax: 0.10.0
libtpu: 0.0.40
codegen_flags: <defaults>
</compile_context>

<pallas_src>
import functools

import jax
import jax.numpy as jnp
from jax.experimental import pallas as pl
from jax.experimental.pallas import tpu as pltpu


def _date_embedding_kernel(ids_ref, word_ref, pos_ref, gamma_ref, beta_ref,
                           out_ref, *, seq_len, eps):
    # ids_ref   : VMEM (B, S)  int32   token ids (raw layout, no wrapper reshape)
    # word_ref  : VMEM (V, H)          word embedding table
    # pos_ref   : VMEM (P, H)          full position embedding table
    # gamma_ref : VMEM (1, H)          LayerNorm weight
    # beta_ref  : VMEM (1, H)          LayerNorm bias
    # out_ref   : VMEM (B, H)  f32     max-over-time result
    B, S = ids_ref.shape
    V, H = word_ref.shape

    ids = ids_ref[...].astype(jnp.int32)                          # (B, S)
    word = word_ref[...].astype(jnp.float32)                      # (V, H)

    # Exact VPU gather: one-hot compare + multiply + sum over the vocab axis.
    # Stays on the VPU/XLU (no MXU round-trip), is bit-exact, and any
    # out-of-range / negative id yields an all-zero embedding row instead of
    # an OOB read (documented divergence from nn.Embedding, which errors).
    vocab_iota = jax.lax.broadcasted_iota(jnp.int32, (B, S, V), 2)
    one_hot = (ids[:, :, None] == vocab_iota).astype(jnp.float32)  # (B, S, V)
    emb = jnp.sum(one_hot[:, :, :, None] * word[None, None, :, :],
                  axis=2)                                          # (B, S, H)

    # absolute position embeddings: static in-kernel slice of the full table,
    # broadcast over batch (no wrapper-side tile).
    pos = pos_ref[:seq_len, :].astype(jnp.float32)                 # (S, H)
    emb = emb + pos[None, :, :]

    # LayerNorm over the hidden dimension
    mean = jnp.mean(emb, axis=-1, keepdims=True)
    var = jnp.mean(jnp.square(emb - mean), axis=-1, keepdims=True)
    x = (emb - mean) * jax.lax.rsqrt(var + eps)
    x = (x * gamma_ref[...].astype(jnp.float32)
         + beta_ref[...].astype(jnp.float32))                      # (1,H) bcast

    # TODO(synk): dropout treated as inference-mode identity (no RNG mask).

    # max over the sequence axis, single (B, H) store
    out_ref[...] = jnp.max(x, axis=1).astype(out_ref.dtype)        # (B, H)


def date_embedding_forward(input_ids, word_emb, pos_emb, ln_weight, ln_bias,
                           *, eps=1e-12):
    """Equivalent of DateEmebdding.forward(input_ids) -> (B, H) float32."""
    B, S = input_ids.shape
    V, H = word_emb.shape
    P = pos_emb.shape[0]
    assert S <= P, f"seq_len {S} exceeds date_max_position_embeddings {P}"

    # NOTE: the full (V, H) table is placed in VMEM -- fine for this module's
    # tiny date vocab.  v7x has half the VMEM of v5e/v6e (64 MiB physical /
    # ~32 MiB default scoped), so for a large vocab switch the table to HBM
    # (pl.BlockSpec(memory_space=pl.ANY) + DMA row-gather, or a scalar-prefetch
    # pl.Element row-gather BlockSpec), which also removes the O(B*S*V)
    # one-hot compare.

    # Only metadata-trivial reshapes in the wrapper; tile / cast / flatten are
    # all done inside the kernel body (single custom call on the hot path).
    gamma2 = ln_weight.reshape(1, H)
    beta2 = ln_bias.reshape(1, H)

    kernel = functools.partial(_date_embedding_kernel, seq_len=S, eps=eps)

    vmem = pltpu.MemorySpace.VMEM
    out = pl.pallas_call(
        kernel,
        out_shape=jax.ShapeDtypeStruct((B, H), jnp.float32),
        in_specs=[
            pl.BlockSpec(memory_space=vmem),   # ids (B, S) int32
            pl.BlockSpec(memory_space=vmem),   # word table (V, H)
            pl.BlockSpec(memory_space=vmem),   # position table (P, H)
            pl.BlockSpec(memory_space=vmem),   # LayerNorm weight (1, H)
            pl.BlockSpec(memory_space=vmem),   # LayerNorm bias (1, H)
        ],
        out_specs=pl.BlockSpec(memory_space=vmem),
    )(input_ids.astype(jnp.int32), word_emb, pos_emb, gamma2, beta2)

    return out                                                     # (B, H)


if __name__ == "__main__":
    # config: date_vocab_size=16, date_hidden_size=32,
    #         date_max_position_embeddings=16, pad_token_id=0,
    #         layer_norm_eps=1e-12
    V, H, P, PAD = 16, 32, 16, 0
    B, S = 2, 8
    EPS = 1e-12

    key = jax.random.PRNGKey(0)
    k_ids, k_word, k_pos = jax.random.split(key, 3)

    input_ids = jax.random.randint(k_ids, (B, S), 0, V, dtype=jnp.int32)

    word_emb = 0.02 * jax.random.normal(k_word, (V, H), dtype=jnp.float32)
    word_emb = word_emb.at[PAD].set(0.0)            # padding_idx row = 0
    pos_emb = 0.02 * jax.random.normal(k_pos, (P, H), dtype=jnp.float32)
    ln_weight = jnp.ones((H,), dtype=jnp.float32)   # nn.LayerNorm init
    ln_bias = jnp.zeros((H,), dtype=jnp.float32)
    # NOTE: self.dense / self.activation exist in __init__ but are unused in forward.

    out = date_embedding_forward(input_ids, word_emb, pos_emb,
                                 ln_weight, ln_bias, eps=EPS)
    out = jax.block_until_ready(out)

    # pure-JAX reference for sanity
    emb = word_emb[input_ids] + pos_emb[:S][None]
    mean = emb.mean(-1, keepdims=True)
    var = ((emb - mean) ** 2).mean(-1, keepdims=True)
    ln = (emb - mean) / jnp.sqrt(var + EPS) * ln_weight + ln_bias
    ref = ln.max(axis=1)

    assert out.shape == (B, H), out.shape
    assert jnp.allclose(out, ref, atol=1e-5, rtol=1e-5), (out, ref)
    print("KERNEL_OK")
</pallas_src>

<mosaic_0001>
module attributes {stable_mosaic.version = 11 : i64} {
  func.func @_date_embedding_kernel(%arg0: memref<2x8xi32, #tpu.memory_space<vmem>>, %arg1: memref<16x32xf32, #tpu.memory_space<vmem>>, %arg2: memref<16x32xf32, #tpu.memory_space<vmem>>, %arg3: memref<1x32xf32, #tpu.memory_space<vmem>>, %arg4: memref<1x32xf32, #tpu.memory_space<vmem>>, %arg5: memref<2x32xf32, #tpu.memory_space<vmem>>) attributes {dimension_semantics = [], scalar_prefetch = 0 : i64, scratch_operands = 0 : i64, tpu.core_type = #tpu.core_type<tc>} {
    %c0 = arith.constant 0 : index
    %c0_0 = arith.constant 0 : index
    %0 = vector.load %arg0[%c0, %c0_0] : memref<2x8xi32, #tpu.memory_space<vmem>>, vector<2x8xi32>
    %c0_1 = arith.constant 0 : index
    %c0_2 = arith.constant 0 : index
    %1 = vector.load %arg1[%c0_1, %c0_2] : memref<16x32xf32, #tpu.memory_space<vmem>>, vector<16x32xf32>
    %2 = tpu.iota {dimensions = array<i32: 2>} : vector<2x8x16xi32>
    %3 = vector.shape_cast %0 : vector<2x8xi32> to vector<2x8x1xi32>
    %4 = vector.broadcast %3 : vector<2x8x1xi32> to vector<2x8x16xi32>
    %5 = arith.cmpi eq, %4, %2 : vector<2x8x16xi32>
    %6 = arith.extui %5 : vector<2x8x16xi1> to vector<2x8x16xi32>
    %7 = arith.sitofp %6 : vector<2x8x16xi32> to vector<2x8x16xf32>
    %8 = vector.shape_cast %7 : vector<2x8x16xf32> to vector<2x8x16x1xf32>
    %9 = vector.shape_cast %1 : vector<16x32xf32> to vector<1x1x16x32xf32>
    %10 = vector.broadcast %8 : vector<2x8x16x1xf32> to vector<2x8x16x32xf32>
    %11 = vector.broadcast %9 : vector<1x1x16x32xf32> to vector<2x8x16x32xf32>
    %12 = arith.mulf %10, %11 : vector<2x8x16x32xf32>
    %cst = arith.constant dense<0.000000e+00> : vector<2x8x32xf32>
    %13 = vector.multi_reduction <add>, %12, %cst [2] : vector<2x8x16x32xf32> to vector<2x8x32xf32>
    %c0_3 = arith.constant 0 : index
    %c0_4 = arith.constant 0 : index
    %14 = vector.load %arg2[%c0_3, %c0_4] : memref<16x32xf32, #tpu.memory_space<vmem>>, vector<8x32xf32>
    %15 = vector.shape_cast %14 : vector<8x32xf32> to vector<1x8x32xf32>
    %16 = vector.broadcast %15 : vector<1x8x32xf32> to vector<2x8x32xf32>
    %17 = arith.addf %13, %16 : vector<2x8x32xf32>
    %cst_5 = arith.constant dense<0.000000e+00> : vector<2x8xf32>
    %18 = vector.multi_reduction <add>, %17, %cst_5 [2] : vector<2x8x32xf32> to vector<2x8xf32>
    %19 = vector.shape_cast %18 : vector<2x8xf32> to vector<2x8x1xf32>
    %cst_6 = arith.constant 3.200000e+01 : f32
    %20 = vector.broadcast %cst_6 : f32 to vector<2x8x1xf32>
    %21 = arith.divf %19, %20 : vector<2x8x1xf32>
    %22 = vector.broadcast %21 : vector<2x8x1xf32> to vector<2x8x32xf32>
    %23 = arith.subf %17, %22 : vector<2x8x32xf32>
    %24 = arith.mulf %23, %23 : vector<2x8x32xf32>
    %cst_7 = arith.constant dense<0.000000e+00> : vector<2x8xf32>
    %25 = vector.multi_reduction <add>, %24, %cst_7 [2] : vector<2x8x32xf32> to vector<2x8xf32>
    %26 = vector.shape_cast %25 : vector<2x8xf32> to vector<2x8x1xf32>
    %cst_8 = arith.constant 3.200000e+01 : f32
    %27 = vector.broadcast %cst_8 : f32 to vector<2x8x1xf32>
    %28 = arith.divf %26, %27 : vector<2x8x1xf32>
    %29 = vector.broadcast %21 : vector<2x8x1xf32> to vector<2x8x32xf32>
    %30 = arith.subf %17, %29 : vector<2x8x32xf32>
    %cst_9 = arith.constant 9.99999996E-13 : f32
    %31 = vector.broadcast %cst_9 : f32 to vector<2x8x1xf32>
    %32 = arith.addf %28, %31 : vector<2x8x1xf32>
    %33 = math.rsqrt %32 : vector<2x8x1xf32>
    %34 = vector.broadcast %33 : vector<2x8x1xf32> to vector<2x8x32xf32>
    %35 = arith.mulf %30, %34 : vector<2x8x32xf32>
    %c0_10 = arith.constant 0 : index
    %c0_11 = arith.constant 0 : index
    %36 = vector.load %arg3[%c0_10, %c0_11] : memref<1x32xf32, #tpu.memory_space<vmem>>, vector<1x32xf32>
    %37 = vector.shape_cast %36 : vector<1x32xf32> to vector<1x1x32xf32>
    %38 = vector.broadcast %37 : vector<1x1x32xf32> to vector<2x8x32xf32>
    %39 = arith.mulf %35, %38 : vector<2x8x32xf32>
    %c0_12 = arith.constant 0 : index
    %c0_13 = arith.constant 0 : index
    %40 = vector.load %arg4[%c0_12, %c0_13] : memref<1x32xf32, #tpu.memory_space<vmem>>, vector<1x32xf32>
    %41 = vector.shape_cast %40 : vector<1x32xf32> to vector<1x1x32xf32>
    %42 = vector.broadcast %41 : vector<1x1x32xf32> to vector<2x8x32xf32>
    %43 = arith.addf %39, %42 : vector<2x8x32xf32>
    %cst_14 = arith.constant dense<0xFF800000> : vector<2x32xf32>
    %44 = vector.multi_reduction <maximumf>, %43, %cst_14 [1] : vector<2x8x32xf32> to vector<2x32xf32>
    %c0_15 = arith.constant 0 : index
    %c0_16 = arith.constant 0 : index
    %45 = vector.load %arg5[%c0_15, %c0_16] : memref<2x32xf32, #tpu.memory_space<vmem>>, vector<2x32xf32>
    tpu.vector_store %arg5[%c0_15, %c0_16], %44 {strides = array<i32>} : memref<2x32xf32, #tpu.memory_space<vmem>>, vector<2x32xf32>,
    return
  }
}

</mosaic_0001>

<llo_original>
// kernel: tpu_custom_call.1
$region0: #{tpu_custom_call.1}
  #allocation0 [shape = 'u32[]', space=smem, size = 0x4, offset = 0x4, fixed_abs, tag = 'smem constant byte address 0x4 - core index']
  #allocation1 [shape = 'u32[144,128]{1,0:T(1,128)}', space=vmem, size = 0x12000, scoped, tag = 'internal scratch']
  %s0 = inlined_call_operand.hbm [shape: s32[2,8], index: 0, kind: input, shape index: {}]
  %s1 = inlined_call_operand.hbm [shape: f32[16,32], index: 1, kind: input, shape index: {}]
  %s2 = inlined_call_operand.hbm [shape: f32[16,32], index: 2, kind: input, shape index: {}]
  %s3 = inlined_call_operand.vmem [shape: f32[1,32], index: 3, kind: input, shape index: {}]
  %s4 = inlined_call_operand.vmem [shape: f32[1,32], index: 4, kind: input, shape index: {}]
  %s5 = inlined_call_operand.hbm [shape: f32[2,32], index: 5, kind: output, shape index: {}]
  %s6 = sld [smem:[#allocation0]]
  $region42: #{tpu_custom_call.1} parent=0
    _
  %s8 = ssub.s32 1, %s6
  %s9 = scalar_select 0, %s8, %s6
  $region1: #{tpu_custom_call.1} parent=0
    #allocation2 [shape = 'u8[1024]{0}', space=vmem, size = 0x400, scoped, tag = 'input window, operand 0, single buffered']
    #allocation3 [shape = 's32[1]{0}', space=sflag, size = 0x4, scoped, tag = 'scoped memory for tpu_custom_call.1']
    #allocation4 [shape = 's32[1]{0}', space=sflag, size = 0x4, scoped, tag = 'scoped memory for tpu_custom_call.1']
    #allocation5 [shape = 'u8[8192]{0}', space=vmem, size = 0x2000, scoped, tag = 'input window, operand 1, single buffered']
    #allocation6 [shape = 's32[1]{0}', space=sflag, size = 0x4, scoped, tag = 'scoped memory for tpu_custom_call.1']
    #allocation7 [shape = 'u8[8192]{0}', space=vmem, size = 0x2000, scoped, tag = 'input window, operand 2, single buffered']
    #allocation8 [shape = 'u8[1024]{0}', space=vmem, size = 0x400, scoped, tag = 'output window, operand 0, single buffered']
    %10 = vsyncpa [#allocation3], 0
    %11 = vsyncpa [#allocation6], 0
    %12 = vsyncpa [#allocation4], 0
    // Predicated region
    $region2: #{tpu_custom_call.1} parent=1 // pred_check
      _
    $region3: #{tpu_custom_call.1} parent=1 // pred_check_branch
      %14 = sbr.rel (0) target = $region5
    $region4: #{tpu_custom_call.1} parent=1 // pred_region
      %s16 = ssub.s32 32, 32
      %17 = vsyncadd [#allocation3], %s16
      %s19 = sshll.u32 [#allocation2], 4
      %s20 = int_to_ptr.vmem [resolvable:$true] %s19
      %22 = dma.hbm_to_vmem [thread:$0]  %s0, 32, %s20, [#allocation3]
    $region5: #{tpu_custom_call.1} parent=1 // pred_fallthru
      _
    // Predicated region
    $region6: #{tpu_custom_call.1} parent=1 // pred_check
      _
    $region7: #{tpu_custom_call.1} parent=1 // pred_check_branch
      %24 = sbr.rel (0) target = $region9
    $region8: #{tpu_custom_call.1} parent=1 // pred_region
      %s26 = ssub.s32 256, 256
      %27 = vsyncadd [#allocation6], %s26
      %s28 = sshll.u32 [#allocation5], 4
      %s29 = int_to_ptr.vmem [resolvable:$true] %s28
      %34 = dma.hbm_to_vmem [thread:$0]  %s1, 256, %s29, [#allocation6], 128, 128, 8
    $region9: #{tpu_custom_call.1} parent=1 // pred_fallthru
      _
    // Predicated region
    $region10: #{tpu_custom_call.1} parent=1 // pred_check
      _
    $region11: #{tpu_custom_call.1} parent=1 // pred_check_branch
      %36 = sbr.rel (0) target = $region13
    $region12: #{tpu_custom_call.1} parent=1 // pred_region
      %s38 = ssub.s32 256, 256
      %39 = vsyncadd [#allocation6], %s38
      %s40 = sshll.u32 [#allocation7], 4
      %s41 = int_to_ptr.vmem [resolvable:$true] %s40
      %46 = dma.hbm_to_vmem [thread:$0]  %s2, 256, %s41, [#allocation6], 128, 128, 8
    $region13: #{tpu_custom_call.1} parent=1 // pred_fallthru
      _
    // Predicated region
    $region14: #{tpu_custom_call.1} parent=1 // pred_check
      _
    $region15: #{tpu_custom_call.1} parent=1 // pred_check_branch
      %48 = sbr.rel (0) target = $region17
    $region16: #{tpu_custom_call.1} parent=1 // pred_region
      _
    $region17: #{tpu_custom_call.1} parent=1 // pred_fallthru
      _
    // Predicated region
    $region18: #{tpu_custom_call.1} parent=1 // pred_check
      _
    $region19: #{tpu_custom_call.1} parent=1 // pred_check_branch
      %50 = sbr.rel (0) target = $region21
    $region20: #{tpu_custom_call.1} parent=1 // pred_region
      _
    $region21: #{tpu_custom_call.1} parent=1 // pred_fallthru
      _
    // Predicated region
    $region22: #{tpu_custom_call.1} parent=1 // pred_check
      _
    $region23: #{tpu_custom_call.1} parent=1 // pred_check_branch
      %52 = sbr.rel (0) target = $region25
    $region24: #{tpu_custom_call.1} parent=1 // pred_region
      %53 = dma.done [#allocation3], 32
    $region25: #{tpu_custom_call.1} parent=1 // pred_fallthru
      _
    // Predicated region
    $region26: #{tpu_custom_call.1} parent=1 // pred_check
      _
    $region27: #{tpu_custom_call.1} parent=1 // pred_check_branch
      %55 = sbr.rel (0) target = $region29
    $region28: #{tpu_custom_call.1} parent=1 // pred_region
      %56 = dma.done [#allocation6], 256
    $region29: #{tpu_custom_call.1} parent=1 // pred_fallthru
      _
    // Predicated region
    $region30: #{tpu_custom_call.1} parent=1 // pred_check
      _
    $region31: #{tpu_custom_call.1} parent=1 // pred_check_branch
      %58 = sbr.rel (0) target = $region33
    $region32: #{tpu_custom_call.1} parent=1 // pred_region
      %59 = dma.done [#allocation6], 256
    $region33: #{tpu_custom_call.1} parent=1 // pred_fallthru
      _
    %v60 = vld [vmem:[#allocation2] sm:$0x3]
    %v61 = vld [vmem:[#allocation5] sm:$0xff]
    %v62 = vld [vmem:[#allocation5 + $0x8] sm:$0xff]
    %v63 = vlaneseq
    %v64 = vand.u32 %v63, 127
    %v65 = vlaneseq
    %v66 = vshrl.u32 %v65, 7
    %v67 = vsub.s32 0, %v66
    %v68 = vrot.slane %v60, %v67
    %70 = vbcast.lane.b32.xlu0 %v68, 256
    %v71 = vpop.permute.xlu0 %70
    %v72 = vlaneseq
    %v73 = vshrl.u32 %v72, 7
    %v74 = vsub.s32 1, %v73
    %v75 = vrot.slane %v60, %v74
    %77 = vbcast.lane.b32.xlu0 %v75, 256
    %v78 = vpop.permute.xlu0 %77
    %vm79 = vcmp.eq.s32.totalorder %v71, %v64
    %vm80 = vcmp.eq.s32.totalorder %v78, %v64
    %v81 = vsel %vm79, 1, 0
    %v82 = vsel %vm80, 1, 0
    %v83 = vcvt.s32.f32 %v81
    %v84 = vcvt.s32.f32 %v82
    %v85 = vlaneseq
    %v86 = vshrl.u32 %v85, 7
    %v87 = vsub.s32 0, %v86
    %v88 = vrot.slane %v83, %v87
    %90 = vbcast.lane.b32.xlu0 %v88, 256
    %v91 = vpop.permute.xlu0 %90
    %s93 = sor.u32 256, 8
    %94 = vbcast.lane.b32.xlu0 %v88, %s93
    %v95 = vpop.permute.xlu0 %94
    %v96 = vlaneseq
    %v97 = vshrl.u32 %v96, 7
    %v98 = vsub.s32 1, %v97
    %v99 = vrot.slane %v83, %v98
    %101 = vbcast.lane.b32.xlu0 %v99, 256
    %v102 = vpop.permute.xlu0 %101
    %s104 = sor.u32 256, 8
    %105 = vbcast.lane.b32.xlu0 %v99, %s104
    %v106 = vpop.permute.xlu0 %105
    %v107 = vlaneseq
    %v108 = vshrl.u32 %v107, 7
    %v109 = vsub.s32 2, %v108
    %v110 = vrot.slane %v83, %v109
    %112 = vbcast.lane.b32.xlu0 %v110, 256
    %v113 = vpop.permute.xlu0 %112
    %s115 = sor.u32 256, 8
    %116 = vbcast.lane.b32.xlu0 %v110, %s115
    %v117 = vpop.permute.xlu0 %116
    %v118 = vlaneseq
    %v119 = vshrl.u32 %v118, 7
    %v120 = vsub.s32 3, %v119
    %v121 = vrot.slane %v83, %v120
    %123 = vbcast.lane.b32.xlu0 %v121, 256
    %v124 = vpop.permute.xlu0 %123
    %s126 = sor.u32 256, 8
    %127 = vbcast.lane.b32.xlu0 %v121, %s126
    %v128 = vpop.permute.xlu0 %127
    %v129 = vlaneseq
    %v130 = vshrl.u32 %v129, 7
    %v131 = vsub.s32 4, %v130
    %v132 = vrot.slane %v83, %v131
    %134 = vbcast.lane.b32.xlu0 %v132, 256
    %v135 = vpop.permute.xlu0 %134
    %s137 = sor.u32 256, 8
    %138 = vbcast.lane.b32.xlu0 %v132, %s137
    %v139 = vpop.permute.xlu0 %138
    %v140 = vlaneseq
    %v141 = vshrl.u32 %v140, 7
    %v142 = vsub.s32 5, %v141
    %v143 = vrot.slane %v83, %v142
    %145 = vbcast.lane.b32.xlu0 %v143, 256
    %v146 = vpop.permute.xlu0 %145
    %s148 = sor.u32 256, 8
    %149 = vbcast.lane.b32.xlu0 %v143, %s148
    %v150 = vpop.permute.xlu0 %149
    %v151 = vlaneseq
    %v152 = vshrl.u32 %v151, 7
    %v153 = vsub.s32 6, %v152
    %v154 = vrot.slane %v83, %v153
    %156 = vbcast.lane.b32.xlu0 %v154, 256
    %v157 = vpop.permute.xlu0 %156
    %s159 = sor.u32 256, 8
    %160 = vbcast.lane.b32.xlu0 %v154, %s159
    %v161 = vpop.permute.xlu0 %160
    %v162 = vlaneseq
    %v163 = vshrl.u32 %v162, 7
    %v164 = vsub.s32 7, %v163
    %v165 = vrot.slane %v83, %v164
    %167 = vbcast.lane.b32.xlu0 %v165, 256
    %v168 = vpop.permute.xlu0 %167
    %s170 = sor.u32 256, 8
    %171 = vbcast.lane.b32.xlu0 %v165, %s170
    %v172 = vpop.permute.xlu0 %171
    %v173 = vlaneseq
    %v174 = vshrl.u32 %v173, 7
    %v175 = vsub.s32 0, %v174
    %v176 = vrot.slane %v84, %v175
    %178 = vbcast.lane.b32.xlu0 %v176, 256
    %v179 = vpop.permute.xlu0 %178
    %s181 = sor.u32 256, 8
    %182 = vbcast.lane.b32.xlu0 %v176, %s181
    %v183 = vpop.permute.xlu0 %182
    %v184 = vlaneseq
    %v185 = vshrl.u32 %v184, 7
    %v186 = vsub.s32 1, %v185
    %v187 = vrot.slane %v84, %v186
    %189 = vbcast.lane.b32.xlu0 %v187, 256
    %v190 = vpop.permute.xlu0 %189
    %s192 = sor.u32 256, 8
    %193 = vbcast.lane.b32.xlu0 %v187, %s192
    %v194 = vpop.permute.xlu0 %193
    %v195 = vlaneseq
    %v196 = vshrl.u32 %v195, 7
    %v197 = vsub.s32 2, %v196
    %v198 = vrot.slane %v84, %v197
    %200 = vbcast.lane.b32.xlu0 %v198, 256
    %v201 = vpop.permute.xlu0 %200
    %s203 = sor.u32 256, 8
    %204 = vbcast.lane.b32.xlu0 %v198, %s203
    %v205 = vpop.permute.xlu0 %204
    %v206 = vlaneseq
    %v207 = vshrl.u32 %v206, 7
    %v208 = vsub.s32 3, %v207
    %v209 = vrot.slane %v84, %v208
    %211 = vbcast.lane.b32.xlu0 %v209, 256
    %v212 = vpop.permute.xlu0 %211
    %s214 = sor.u32 256, 8
    %215 = vbcast.lane.b32.xlu0 %v209, %s214
    %v216 = vpop.permute.xlu0 %215
    %v217 = vlaneseq
    %v218 = vshrl.u32 %v217, 7
    %v219 = vsub.s32 4, %v218
    %v220 = vrot.slane %v84, %v219
    %222 = vbcast.lane.b32.xlu0 %v220, 256
    %v223 = vpop.permute.xlu0 %222
    %s225 = sor.u32 256, 8
    %226 = vbcast.lane.b32.xlu0 %v220, %s225
    %v227 = vpop.permute.xlu0 %226
    %v228 = vlaneseq
    %v229 = vshrl.u32 %v228, 7
    %v230 = vsub.s32 5, %v229
    %v231 = vrot.slane %v84, %v230
    %233 = vbcast.lane.b32.xlu0 %v231, 256
    %v234 = vpop.permute.xlu0 %233
    %s236 = sor.u32 256, 8
    %237 = vbcast.lane.b32.xlu0 %v231, %s236
    %v238 = vpop.permute.xlu0 %237
    %v239 = vlaneseq
    %v240 = vshrl.u32 %v239, 7
    %v241 = vsub.s32 6, %v240
    %v242 = vrot.slane %v84, %v241
    %244 = vbcast.lane.b32.xlu0 %v242, 256
    %v245 = vpop.permute.xlu0 %244
    %s247 = sor.u32 256, 8
    %248 = vbcast.lane.b32.xlu0 %v242, %s247
    %v249 = vpop.permute.xlu0 %248
    %v250 = vlaneseq
    %v251 = vshrl.u32 %v250, 7
    %v252 = vsub.s32 7, %v251
    %v253 = vrot.slane %v84, %v252
    %255 = vbcast.lane.b32.xlu0 %v253, 256
    %v256 = vpop.permute.xlu0 %255
    %s258 = sor.u32 256, 8
    %259 = vbcast.lane.b32.xlu0 %v253, %s258
    %v260 = vpop.permute.xlu0 %259
    %v261 = vmul.f32 %v91, %v61
    %v262 = vmul.f32 %v95, %v62
    %v263 = vmul.f32 %v102, %v61
    %v264 = vmul.f32 %v106, %v62
    %v265 = vmul.f32 %v113, %v61
    %v266 = vmul.f32 %v117, %v62
    %v267 = vmul.f32 %v124, %v61
    %v268 = vmul.f32 %v128, %v62
    %v269 = vmul.f32 %v135, %v61
    %v270 = vmul.f32 %v139, %v62
    %v271 = vmul.f32 %v146, %v61
    %v272 = vmul.f32 %v150, %v62
    %v273 = vmul.f32 %v157, %v61
    %v274 = vmul.f32 %v161, %v62
    %v275 = vmul.f32 %v168, %v61
    %v276 = vmul.f32 %v172, %v62
    %v277 = vmul.f32 %v179, %v61
    %v278 = vmul.f32 %v183, %v62
    %v279 = vmul.f32 %v190, %v61
    %v280 = vmul.f32 %v194, %v62
    %v281 = vmul.f32 %v201, %v61
    %v282 = vmul.f32 %v205, %v62
    %v283 = vmul.f32 %v212, %v61
    %v284 = vmul.f32 %v216, %v62
    %v285 = vmul.f32 %v223, %v61
    %v286 = vmul.f32 %v227, %v62
    %v287 = vmul.f32 %v234, %v61
    %v288 = vmul.f32 %v238, %v62
    %v289 = vmul.f32 %v245, %v61
    %v290 = vmul.f32 %v249, %v62
    %v291 = vmul.f32 %v256, %v61
    %v292 = vmul.f32 %v260, %v62
    %vm293 = vcmask 261120
    %v294 = vsel %vm293, %v261, 0.0
    %v295 = vsel %vm293, %v262, 0.0
    %v296 = vadd.f32 %v294, %v295
    %v297 = vrot.slane %v296, 4
    %v298 = vadd.f32 %v296, %v297
    %v299 = vrot.slane %v298, 2
    %v300 = vadd.f32 %v298, %v299
    %v301 = vrot.slane %v300, 1
    %v302 = vadd.f32 %v300, %v301
    %v303 = vsel %vm293, %v263, 0.0
    %v304 = vsel %vm293, %v264, 0.0
    %v305 = vadd.f32 %v303, %v304
    %v306 = vrot.slane %v305, 4
    %v307 = vadd.f32 %v305, %v306
    %v308 = vrot.slane %v307, 2
    %v309 = vadd.f32 %v307, %v308
    %v310 = vrot.slane %v309, 1
    %v311 = vadd.f32 %v309, %v310
    %v312 = vsel %vm293, %v265, 0.0
    %v313 = vsel %vm293, %v266, 0.0
    %v314 = vadd.f32 %v312, %v313
    %v315 = vrot.slane %v314, 4
    %v316 = vadd.f32 %v314, %v315
    %v317 = vrot.slane %v316, 2
    %v318 = vadd.f32 %v316, %v317
    %v319 = vrot.slane %v318, 1
    %v320 = vadd.f32 %v318, %v319
    %v321 = vsel %vm293, %v267, 0.0
    %v322 = vsel %vm293, %v268, 0.0
    %v323 = vadd.f32 %v321, %v322
    %v324 = vrot.slane %v323, 4
    %v325 = vadd.f32 %v323, %v324
    %v326 = vrot.slane %v325, 2
    %v327 = vadd.f32 %v325, %v326
    %v328 = vrot.slane %v327, 1
    %v329 = vadd.f32 %v327, %v328
    %v330 = vsel %vm293, %v269, 0.0
    %v331 = vsel %vm293, %v270, 0.0
    %v332 = vadd.f32 %v330, %v331
    %v333 = vrot.slane %v332, 4
    %v334 = vadd.f32 %v332, %v333
    %v335 = vrot.slane %v334, 2
    %v336 = vadd.f32 %v334, %v335
    %v337 = vrot.slane %v336, 1
    %v338 = vadd.f32 %v336, %v337
    %v339 = vsel %vm293, %v271, 0.0
    %v340 = vsel %vm293, %v272, 0.0
    %v341 = vadd.f32 %v339, %v340
    %v342 = vrot.slane %v341, 4
    %v343 = vadd.f32 %v341, %v342
    %v344 = vrot.slane %v343, 2
    %v345 = vadd.f32 %v343, %v344
    %v346 = vrot.slane %v345, 1
    %v347 = vadd.f32 %v345, %v346
    %v348 = vsel %vm293, %v273, 0.0
    %v349 = vsel %vm293, %v274, 0.0
    %v350 = vadd.f32 %v348, %v349
    %v351 = vrot.slane %v350, 4
    %v352 = vadd.f32 %v350, %v351
    %v353 = vrot.slane %v352, 2
    %v354 = vadd.f32 %v352, %v353
    %v355 = vrot.slane %v354, 1
    %v356 = vadd.f32 %v354, %v355
    %v357 = vsel %vm293, %v275, 0.0
    %v358 = vsel %vm293, %v276, 0.0
    %v359 = vadd.f32 %v357, %v358
    %v360 = vrot.slane %v359, 4
    %v361 = vadd.f32 %v359, %v360
    %v362 = vrot.slane %v361, 2
    %v363 = vadd.f32 %v361, %v362
    %v364 = vrot.slane %v363, 1
    %v365 = vadd.f32 %v363, %v364
    %v366 = vsel %vm293, %v277, 0.0
    %v367 = vsel %vm293, %v278, 0.0
    %v368 = vadd.f32 %v366, %v367
    %v369 = vrot.slane %v368, 4
    %v370 = vadd.f32 %v368, %v369
    %v371 = vrot.slane %v370, 2
    %v372 = vadd.f32 %v370, %v371
    %v373 = vrot.slane %v372, 1
    %v374 = vadd.f32 %v372, %v373
    %v375 = vsel %vm293, %v279, 0.0
    %v376 = vsel %vm293, %v280, 0.0
    %v377 = vadd.f32 %v375, %v376
    %v378 = vrot.slane %v377, 4
    %v379 = vadd.f32 %v377, %v378
    %v380 = vrot.slane %v379, 2
    %v381 = vadd.f32 %v379, %v380
    %v382 = vrot.slane %v381, 1
    %v383 = vadd.f32 %v381, %v382
    %v384 = vsel %vm293, %v281, 0.0
    %v385 = vsel %vm293, %v282, 0.0
    %v386 = vadd.f32 %v384, %v385
    %v387 = vrot.slane %v386, 4
    %v388 = vadd.f32 %v386, %v387
    %v389 = vrot.slane %v388, 2
    %v390 = vadd.f32 %v388, %v389
    %v391 = vrot.slane %v390, 1
    %v392 = vadd.f32 %v390, %v391
    %v393 = vsel %vm293, %v283, 0.0
    %v394 = vsel %vm293, %v284, 0.0
    %v395 = vadd.f32 %v393, %v394
    %v396 = vrot.slane %v395, 4
    %v397 = vadd.f32 %v395, %v396
    %v398 = vrot.slane %v397, 2
    %v399 = vadd.f32 %v397, %v398
    %v400 = vrot.slane %v399, 1
    %v401 = vadd.f32 %v399, %v400
    %v402 = vsel %vm293, %v285, 0.0
    %v403 = vsel %vm293, %v286, 0.0
    %v404 = vadd.f32 %v402, %v403
    %v405 = vrot.slane %v404, 4
    %v406 = vadd.f32 %v404, %v405
    %v407 = vrot.slane %v406, 2
    %v408 = vadd.f32 %v406, %v407
    %v409 = vrot.slane %v408, 1
    %v410 = vadd.f32 %v408, %v409
    %v411 = vsel %vm293, %v287, 0.0
    %v412 = vsel %vm293, %v288, 0.0
    %v413 = vadd.f32 %v411, %v412
    %v414 = vrot.slane %v413, 4
    %v415 = vadd.f32 %v413, %v414
    %v416 = vrot.slane %v415, 2
    %v417 = vadd.f32 %v415, %v416
    %v418 = vrot.slane %v417, 1
    %v419 = vadd.f32 %v417, %v418
    %v420 = vsel %vm293, %v289, 0.0
    %v421 = vsel %vm293, %v290, 0.0
    %v422 = vadd.f32 %v420, %v421
    %v423 = vrot.slane %v422, 4
    %v424 = vadd.f32 %v422, %v423
    %v425 = vrot.slane %v424, 2
    %v426 = vadd.f32 %v424, %v425
    %v427 = vrot.slane %v426, 1
    %v428 = vadd.f32 %v426, %v427
    %v429 = vsel %vm293, %v291, 0.0
    %v430 = vsel %vm293, %v292, 0.0
    %v431 = vadd.f32 %v429, %v430
    %v432 = vrot.slane %v431, 4
    %v433 = vadd.f32 %v431, %v432
    %v434 = vrot.slane %v433, 2
    %v435 = vadd.f32 %v433, %v434
    %v436 = vrot.slane %v435, 1
    %v437 = vadd.f32 %v435, %v436
    %v438 = vld [vmem:[#allocation7] sm:$0xff]
    %v440 = vrot.slane %v438, 1
    %v441 = vrot.slane %v438, 2
    %v442 = vrot.slane %v438, 3
    %v443 = vrot.slane %v438, 4
    %v444 = vrot.slane %v438, 5
    %v445 = vrot.slane %v438, 6
    %v446 = vrot.slane %v438, 7
    %v455 = vadd.f32 %v302, %v438
    %v456 = vadd.f32 %v311, %v440
    %v457 = vadd.f32 %v320, %v441
    %v458 = vadd.f32 %v329, %v442
    %v459 = vadd.f32 %v338, %v443
    %v460 = vadd.f32 %v347, %v444
    %v461 = vadd.f32 %v356, %v445
    %v462 = vadd.f32 %v365, %v446
    %v463 = vadd.f32 %v374, %v438
    %v464 = vadd.f32 %v383, %v440
    %v465 = vadd.f32 %v392, %v441
    %v466 = vadd.f32 %v401, %v442
    %v467 = vadd.f32 %v410, %v443
    %v468 = vadd.f32 %v419, %v444
    %v469 = vadd.f32 %v428, %v445
    %v470 = vadd.f32 %v437, %v446
    %v487 = vrot.slane %v456, 7
    %vm488 = vcmask 1041409
    %v489 = vsel %vm488, %v487, %v455
    %v490 = vrot.slane %v457, 6
    %vm491 = vcmask 1042434
    %v492 = vsel %vm491, %v490, %v489
    %v493 = vrot.slane %v458, 5
    %vm494 = vcmask 1043459
    %v495 = vsel %vm494, %v493, %v492
    %v496 = vrot.slane %v459, 4
    %vm497 = vcmask 1044484
    %v498 = vsel %vm497, %v496, %v495
    %v499 = vrot.slane %v460, 3
    %vm500 = vcmask 1045509
    %v501 = vsel %vm500, %v499, %v498
    %v502 = vrot.slane %v461, 2
    %vm503 = vcmask 1046534
    %v504 = vsel %vm503, %v502, %v501
    %v505 = vrot.slane %v462, 1
    %vm506 = vcmask 1047559
    %v507 = vsel %vm506, %v505, %v504
    %v508 = vrot.slane %v464, 7
    %v509 = vsel %vm488, %v508, %v463
    %v510 = vrot.slane %v465, 6
    %v511 = vsel %vm491, %v510, %v509
    %v512 = vrot.slane %v466, 5
    %v513 = vsel %vm494, %v512, %v511
    %v514 = vrot.slane %v467, 4
    %v515 = vsel %vm497, %v514, %v513
    %v516 = vrot.slane %v468, 3
    %v517 = vsel %vm500, %v516, %v515
    %v518 = vrot.slane %v469, 2
    %v519 = vsel %vm503, %v518, %v517
    %v520 = vrot.slane %v470, 1
    %v521 = vsel %vm506, %v520, %v519
    %v524 = vsel %vm293, %v507, 0.0
    %525 = vadd.xlane.f32.xlu0 %v524
    %v526 = vpop.xlane.xlu0 %525
    %v527 = vsel %vm293, %v521, 0.0
    %528 = vadd.xlane.f32.xlu0 %v527
    %v529 = vpop.xlane.xlu0 %528
    %v530 = vrcp.pop 32.0
    %v531 = vmul.f32 %v526, %v530
    %v532 = vmul.f32 %v529, %v530
    %v535 = vrot.slane %v531, 1
    %v536 = vrot.slane %v531, 2
    %v537 = vrot.slane %v531, 3
    %v538 = vrot.slane %v531, 4
    %v539 = vrot.slane %v531, 5
    %v540 = vrot.slane %v531, 6
    %v541 = vrot.slane %v531, 7
    %v542 = vrot.slane %v532, 1
    %v543 = vrot.slane %v532, 2
    %v544 = vrot.slane %v532, 3
    %v545 = vrot.slane %v532, 4
    %v546 = vrot.slane %v532, 5
    %v547 = vrot.slane %v532, 6
    %v548 = vrot.slane %v532, 7
    %v565 = vsub.f32 %v455, %v531
    %v566 = vsub.f32 %v456, %v535
    %v567 = vsub.f32 %v457, %v536
    %v568 = vsub.f32 %v458, %v537
    %v569 = vsub.f32 %v459, %v538
    %v570 = vsub.f32 %v460, %v539
    %v571 = vsub.f32 %v461, %v540
    %v572 = vsub.f32 %v462, %v541
    %v573 = vsub.f32 %v463, %v532
    %v574 = vsub.f32 %v464, %v542
    %v575 = vsub.f32 %v465, %v543
    %v576 = vsub.f32 %v466, %v544
    %v577 = vsub.f32 %v467, %v545
    %v578 = vsub.f32 %v468, %v546
    %v579 = vsub.f32 %v469, %v547
    %v580 = vsub.f32 %v470, %v548
    %v581 = vmul.f32 %v565, %v565
    %v582 = vmul.f32 %v566, %v566
    %v583 = vmul.f32 %v567, %v567
    %v584 = vmul.f32 %v568, %v568
    %v585 = vmul.f32 %v569, %v569
    %v586 = vmul.f32 %v570, %v570
    %v587 = vmul.f32 %v571, %v571
    %v588 = vmul.f32 %v572, %v572
    %v589 = vmul.f32 %v573, %v573
    %v590 = vmul.f32 %v574, %v574
    %v591 = vmul.f32 %v575, %v575
    %v592 = vmul.f32 %v576, %v576
    %v593 = vmul.f32 %v577, %v577
    %v594 = vmul.f32 %v578, %v578
    %v595 = vmul.f32 %v579, %v579
    %v596 = vmul.f32 %v580, %v580
    %v613 = vrot.slane %v582, 7
    %v614 = vsel %vm488, %v613, %v581
    %v615 = vrot.slane %v583, 6
    %v616 = vsel %vm491, %v615, %v614
    %v617 = vrot.slane %v584, 5
    %v618 = vsel %vm494, %v617, %v616
    %v619 = vrot.slane %v585, 4
    %v620 = vsel %vm497, %v619, %v618
    %v621 = vrot.slane %v586, 3
    %v622 = vsel %vm500, %v621, %v620
    %v623 = vrot.slane %v587, 2
    %v624 = vsel %vm503, %v623, %v622
    %v625 = vrot.slane %v588, 1
    %v626 = vsel %vm506, %v625, %v624
    %v627 = vrot.slane %v590, 7
    %v628 = vsel %vm488, %v627, %v589
    %v629 = vrot.slane %v591, 6
    %v630 = vsel %vm491, %v629, %v628
    %v631 = vrot.slane %v592, 5
    %v632 = vsel %vm494, %v631, %v630
    %v633 = vrot.slane %v593, 4
    %v634 = vsel %vm497, %v633, %v632
    %v635 = vrot.slane %v594, 3
    %v636 = vsel %vm500, %v635, %v634
    %v637 = vrot.slane %v595, 2
    %v638 = vsel %vm503, %v637, %v636
    %v639 = vrot.slane %v596, 1
    %v640 = vsel %vm506, %v639, %v638
    %v643 = vsel %vm293, %v626, 0.0
    %644 = vadd.xlane.f32.xlu0 %v643
    %v645 = vpop.xlane.xlu0 %644
    %v646 = vsel %vm293, %v640, 0.0
    %647 = vadd.xlane.f32.xlu0 %v646
    %v648 = vpop.xlane.xlu0 %647
    %v649 = vmul.f32 %v645, %v530
    %v650 = vmul.f32 %v648, %v530
    %v651 = vadd.f32 %v649, 1e-12
    %v652 = vadd.f32 %v650, 1e-12
    %v653 = vrsqrt.pop %v651
    %v654 = vrsqrt.pop %v652
    %v657 = vrot.slane %v653, 1
    %v658 = vrot.slane %v653, 2
    %v659 = vrot.slane %v653, 3
    %v660 = vrot.slane %v653, 4
    %v661 = vrot.slane %v653, 5
    %v662 = vrot.slane %v653, 6
    %v663 = vrot.slane %v653, 7
    %v664 = vrot.slane %v654, 1
    %v665 = vrot.slane %v654, 2
    %v666 = vrot.slane %v654, 3
    %v667 = vrot.slane %v654, 4
    %v668 = vrot.slane %v654, 5
    %v669 = vrot.slane %v654, 6
    %v670 = vrot.slane %v654, 7
    %v687 = vmul.f32 %v565, %v653
    %v688 = vmul.f32 %v566, %v657
    %v689 = vmul.f32 %v567, %v658
    %v690 = vmul.f32 %v568, %v659
    %v691 = vmul.f32 %v569, %v660
    %v692 = vmul.f32 %v570, %v661
    %v693 = vmul.f32 %v571, %v662
    %v694 = vmul.f32 %v572, %v663
    %v695 = vmul.f32 %v573, %v654
    %v696 = vmul.f32 %v574, %v664
    %v697 = vmul.f32 %v575, %v665
    %v698 = vmul.f32 %v576, %v666
    %v699 = vmul.f32 %v577, %v667
    %v700 = vmul.f32 %v578, %v668
    %v701 = vmul.f32 %v579, %v669
    %v702 = vmul.f32 %v580, %v670
    %v703 = vld [vmem:[%s3] sm:$0x1]
    %v705 = vlaneseq
    %v706 = vshrl.u32 %v705, 7
    %v707 = vsub.s32 0, %v706
    %v708 = vrot.slane %v703, %v707
    %v710 = vmul.f32 %v687, %v708
    %v711 = vmul.f32 %v688, %v708
    %v712 = vmul.f32 %v689, %v708
    %v713 = vmul.f32 %v690, %v708
    %v714 = vmul.f32 %v691, %v708
    %v715 = vmul.f32 %v692, %v708
    %v716 = vmul.f32 %v693, %v708
    %v717 = vmul.f32 %v694, %v708
    %v718 = vmul.f32 %v695, %v708
    %v719 = vmul.f32 %v696, %v708
    %v720 = vmul.f32 %v697, %v708
    %v721 = vmul.f32 %v698, %v708
    %v722 = vmul.f32 %v699, %v708
    %v723 = vmul.f32 %v700, %v708
    %v724 = vmul.f32 %v701, %v708
    %v725 = vmul.f32 %v702, %v708
    %v726 = vld [vmem:[%s4] sm:$0x1]
    %v728 = vlaneseq
    %v729 = vshrl.u32 %v728, 7
    %v730 = vsub.s32 0, %v729
    %v731 = vrot.slane %v726, %v730
    %v733 = vadd.f32 %v710, %v731
    %v734 = vadd.f32 %v711, %v731
    %v735 = vadd.f32 %v712, %v731
    %v736 = vadd.f32 %v713, %v731
    %v737 = vadd.f32 %v714, %v731
    %v738 = vadd.f32 %v715, %v731
    %v739 = vadd.f32 %v716, %v731
    %v740 = vadd.f32 %v717, %v731
    %v741 = vadd.f32 %v718, %v731
    %v742 = vadd.f32 %v719, %v731
    %v743 = vadd.f32 %v720, %v731
    %v744 = vadd.f32 %v721, %v731
    %v745 = vadd.f32 %v722, %v731
    %v746 = vadd.f32 %v723, %v731
    %v747 = vadd.f32 %v724, %v731
    %v748 = vadd.f32 %v725, %v731
    %vm749 = vcmask 253952
    %v750 = vsel %vm749, %v733, -inf
    %v751 = vsel %vm749, %v734, -inf
    %v752 = vsel %vm749, %v735, -inf
    %v753 = vmax.f32 %v750, %v752
    %v754 = vsel %vm749, %v736, -inf
    %v755 = vmax.f32 %v751, %v754
    %v756 = vsel %vm749, %v737, -inf
    %v757 = vmax.f32 %v753, %v756
    %v758 = vsel %vm749, %v738, -inf
    %v759 = vmax.f32 %v755, %v758
    %v760 = vsel %vm749, %v739, -inf
    %v761 = vmax.f32 %v757, %v760
    %v762 = vsel %vm749, %v740, -inf
    %v763 = vmax.f32 %v759, %v762
    %v764 = vmax.f32 %v761, %v763
    %v765 = vsel %vm749, %v741, -inf
    %v766 = vsel %vm749, %v742, -inf
    %v767 = vsel %vm749, %v743, -inf
    %v768 = vmax.f32 %v765, %v767
    %v769 = vsel %vm749, %v744, -inf
    %v770 = vmax.f32 %v766, %v769
    %v771 = vsel %vm749, %v745, -inf
    %v772 = vmax.f32 %v768, %v771
    %v773 = vsel %vm749, %v746, -inf
    %v774 = vmax.f32 %v770, %v773
    %v775 = vsel %vm749, %v747, -inf
    %v776 = vmax.f32 %v772, %v775
    %v777 = vsel %vm749, %v748, -inf
    %v778 = vmax.f32 %v774, %v777
    %v779 = vmax.f32 %v776, %v778
    %v782 = vrot.slane %v779, 7
    %v783 = vsel %vm488, %v782, %v764
    %vm785 = vcmask 254976
    %786 = vst.msk [vmem:[#allocation8] sm:$0x3] %vm785, %v783
    // Predicated region
    $region34: #{tpu_custom_call.1} parent=1 // pred_check
      _
    $region35: #{tpu_custom_call.1} parent=1 // pred_check_branch
      %788 = sbr.rel (0) target = $region37
    $region36: #{tpu_custom_call.1} parent=1 // pred_region
      %s790 = ssub.s32 32, 32
      %791 = vsyncadd [#allocation4], %s790
      %s793 = sshll.u32 [#allocation8], 4
      %s794 = int_to_ptr.vmem [resolvable:$true] %s793
      %796 = dma.vmem_to_hbm [thread:$0]  %s794, 32, %s5, [#allocation4]
    $region37: #{tpu_custom_call.1} parent=1 // pred_fallthru
      _
    // Predicated region
    $region38: #{tpu_custom_call.1} parent=1 // pred_check
      _
    $region39: #{tpu_custom_call.1} parent=1 // pred_check_branch
      %798 = sbr.rel (0) target = $region41
    $region40: #{tpu_custom_call.1} parent=1 // pred_region
      %799 = dma.done [#allocation4], 32
    $region41: #{tpu_custom_call.1} parent=1 // pred_fallthru
      _
    %800 = vsyncpa [#allocation3], 1
    %801 = vsyncpa [#allocation6], 1
    %802 = vsyncpa [#allocation4], 1

</llo_original>
